<compile_context>
chip_gen: v7x
topology: tpu7x:2x2x1
jax: 0.10.0
libtpu: 0.0.40
codegen_flags: <defaults>
</compile_context>

<pallas_src>
import math

import jax
import jax.numpy as jnp
from jax.experimental import pallas as pl
from jax.experimental.pallas import tpu as pltpu

_LOG_2PI = math.log(2.0 * math.pi)

NUM_CORES = 2       # parallel split of the sample range (2 TCs on v7x)
MAX_TILE_R = 128    # sublane-rows per tile -> up to 128*128 = 16384 samples/step


def _cdiv(a, b):
    return -(-a // b)


def _distance_nll_sum_kernel(data_ref, out_ref, acc_ref):
    """Partial-sum NLL of a 2-D MVN parameterized by a lower Cholesky factor.

    data_ref : (8, tile_r, 128) f32 block; rows are
               [mu0, mu1, x0, x1, L00, L10, L11, valid_mask]
    out_ref  : (1, 1, 1) f32 — this core's partial sum (written on last step)
    acc_ref  : (tile_r, 128) f32 VMEM scratch — elementwise running accumulator
    """
    i = pl.program_id(1)

    @pl.when(i == 0)
    def _():
        acc_ref[...] = jnp.zeros_like(acc_ref)

    mu0 = data_ref[0]
    mu1 = data_ref[1]
    x0 = data_ref[2]
    x1 = data_ref[3]
    l00 = data_ref[4]
    l10 = data_ref[5]
    l11 = data_ref[6]
    valid = data_ref[7]

    # Forward-substitution solve of L z = (x - mu) for the 2x2 lower-tri L.
    z0 = (x0 - mu0) / l00
    z1 = ((x1 - mu1) - l10 * z0) / l11

    # NLL = 0.5*||z||^2 + log|det L| + 0.5*D*log(2*pi), D = 2.
    # Fused log: log(l00) + log(l11) -> log(l00 * l11)  (one EUP op).
    nll = 0.5 * (z0 * z0 + z1 * z1) + jnp.log(l00 * l11) + _LOG_2PI

    # Padded lanes carry valid == 0 (and L = I, diff = 0 so nll is finite):
    # their contribution is exactly zero.  Pure VPU work, no iota/select.
    acc_ref[...] += valid * nll

    @pl.when(i == pl.num_programs(1) - 1)
    def _():
        out_ref[...] = jnp.sum(acc_ref[...]).reshape(1, 1, 1)


def distance_nll_loss(pred_positions, pred_std_cholesky, true_positions,
                      detach_likelihood_mean=False, weight=1.0):
    """Forward pass of DistanceNLLLoss (returns the mean NLL, a scalar).

    `weight` is stored by the module but only used in weighted_loss(), not in
    forward(); `detach_likelihood_mean` is a gradient-only flag.
    """
    if detach_likelihood_mean:
        pred_positions = jax.lax.stop_gradient(pred_positions)

    n, d = pred_positions.shape
    assert d == 2, "DistanceNLLLoss kernel is specialized for 2-D positions"

    mu = pred_positions.astype(jnp.float32)
    x = true_positions.astype(jnp.float32)
    L = pred_std_cholesky.astype(jnp.float32)

    # Tiling: samples -> (row, lane) with lane width 128.
    r = _cdiv(n, 128)                                   # sublane-rows needed
    tile_r = min(MAX_TILE_R, _cdiv(r, 8) * 8)           # multiple of 8
    blocks_per_core = _cdiv(r, tile_r * NUM_CORES)
    r_pad = blocks_per_core * tile_r * NUM_CORES
    n_pad = r_pad * 128

    # Pack the 7 feature streams + validity mask into one (8, N) array.
    # TODO(synk): if the upstream model can emit this packed feature-major
    # layout directly, the stack/transpose below disappears entirely.
    feat = jnp.stack(
        [mu[:, 0], mu[:, 1],
         x[:, 0], x[:, 1],
         L[:, 0, 0], L[:, 1, 0], L[:, 1, 1],
         jnp.ones((n,), jnp.float32)],                  # validity mask
        axis=0)                                         # (8, N)

    pad = n_pad - n
    if pad:
        # Safe padding: mu = x = 0, L = I, mask = 0 -> finite math, zero
        # contribution after masking.
        pad_col = jnp.array([0., 0., 0., 0., 1., 0., 1., 0.],
                            jnp.float32)[:, None]
        feat = jnp.concatenate(
            [feat, jnp.broadcast_to(pad_col, (8, pad))], axis=1)

    packed = feat.reshape(8, r_pad, 128)                # (8, R, 128)

    def in_index_map(c, i, bpc=blocks_per_core):
        return (0, c * bpc + i, 0)

    partial_sums = pl.pallas_call(
        _distance_nll_sum_kernel,
        out_shape=jax.ShapeDtypeStruct((NUM_CORES, 1, 1), jnp.float32),
        grid_spec=pltpu.PrefetchScalarGridSpec(
            num_scalar_prefetch=0,
            grid=(NUM_CORES, blocks_per_core),
            in_specs=[pl.BlockSpec((8, tile_r, 128), in_index_map)],
            out_specs=pl.BlockSpec((1, 1, 1), lambda c, i: (c, 0, 0)),
            scratch_shapes=[pltpu.VMEM((tile_r, 128), jnp.float32)],
        ),
        compiler_params=pltpu.CompilerParams(
            dimension_semantics=("parallel", "arbitrary")),
    )(packed)

    # Mean over the true number of samples (division kept out of the kernel).
    return jnp.sum(partial_sums) / jnp.float32(n)


def _reference_nll(pred_positions, pred_std_cholesky, true_positions):
    """Pure-JAX reference matching torch.distributions.MultivariateNormal."""
    diff = (true_positions - pred_positions).astype(jnp.float32)
    L = pred_std_cholesky.astype(jnp.float32)
    z0 = diff[:, 0] / L[:, 0, 0]
    z1 = (diff[:, 1] - L[:, 1, 0] * z0) / L[:, 1, 1]
    maha = z0 * z0 + z1 * z1
    logdet = jnp.log(L[:, 0, 0]) + jnp.log(L[:, 1, 1])
    nll = 0.5 * maha + logdet + _LOG_2PI
    return nll.mean()


def _make_inputs(key, n):
    k1, k2, k3, k4 = jax.random.split(key, 4)
    pred_positions = jax.random.normal(k1, (n, 2), dtype=jnp.float32) * 2.0
    true_positions = pred_positions + 0.1 * jax.random.normal(
        k2, (n, 2), dtype=jnp.float32)
    # Valid lower-triangular Cholesky: positive diagonal, arbitrary lower entry.
    diag = jax.nn.softplus(jax.random.normal(k3, (n, 2), dtype=jnp.float32)) + 0.1
    off = 0.3 * jax.random.normal(k4, (n,), dtype=jnp.float32)
    chol = jnp.zeros((n, 2, 2), dtype=jnp.float32)
    chol = chol.at[:, 0, 0].set(diag[:, 0])
    chol = chol.at[:, 1, 1].set(diag[:, 1])
    chol = chol.at[:, 1, 0].set(off)
    return pred_positions, chol, true_positions


if __name__ == "__main__":
    key = jax.random.PRNGKey(0)
    k_small, k_big = jax.random.split(key)

    # Small case (200 predicted electron positions, 2-D coordinates).
    pred, chol, true = _make_inputs(k_small, 200)
    loss = distance_nll_loss(pred, chol, true,
                             detach_likelihood_mean=True, weight=1.0)
    loss = jax.block_until_ready(loss)
    ref = _reference_nll(pred, chol, true)
    assert jnp.allclose(loss, ref, rtol=1e-5, atol=1e-5), (loss, ref)

    # Larger case: exercises multi-step accumulation and the 2-core split.
    pred2, chol2, true2 = _make_inputs(k_big, 70_000)
    loss2 = distance_nll_loss(pred2, chol2, true2,
                              detach_likelihood_mean=False, weight=1.0)
    loss2 = jax.block_until_ready(loss2)
    ref2 = _reference_nll(pred2, chol2, true2)
    assert jnp.allclose(loss2, ref2, rtol=1e-4, atol=1e-4), (loss2, ref2)

    print("KERNEL_OK")
</pallas_src>

<mosaic_0001>
module attributes {stable_mosaic.version = 11 : i64} {
  func.func @_distance_nll_sum_kernel(%arg0: i32, %arg1: i32, %arg2: memref<8x8x128xf32, #tpu.memory_space<vmem>>, %arg3: memref<1x1x1xf32, #tpu.memory_space<vmem>>, %arg4: memref<8x128xf32, #tpu.memory_space<vmem>>) attributes {dimension_semantics = [#tpu.dimension_semantics<parallel>, #tpu.dimension_semantics<arbitrary>], iteration_bounds = array<i64: 2, 1>, scalar_prefetch = 0 : i64, scratch_operands = 1 : i64, tpu.core_type = #tpu.core_type<tc>, window_params = [{transform_indices = @transform_0, window_bounds = array<i64: 8, 8, 128>}, {transform_indices = @transform_1, window_bounds = array<i64: 1, 1, 1>}]} {
    %c0_i32 = arith.constant 0 : i32
    %0 = arith.cmpi eq, %arg1, %c0_i32 : i32
    %1 = arith.extui %0 : i1 to i32
    %c0_i32_0 = arith.constant 0 : i32
    %2 = arith.cmpi ne, %1, %c0_i32_0 : i32
    scf.if %2 {
      %cst_24 = arith.constant 0.000000e+00 : f32
      %42 = vector.broadcast %cst_24 : f32 to vector<8x128xf32>
      %c0_25 = arith.constant 0 : index
      %c0_26 = arith.constant 0 : index
      %43 = vector.load %arg4[%c0_25, %c0_26] : memref<8x128xf32, #tpu.memory_space<vmem>>, vector<8x128xf32>
      tpu.vector_store %arg4[%c0_25, %c0_26], %42 {strides = array<i32>} : memref<8x128xf32, #tpu.memory_space<vmem>>, vector<8x128xf32>,
    } else {
    }
    %c0 = arith.constant 0 : index
    %c0_1 = arith.constant 0 : index
    %c0_2 = arith.constant 0 : index
    %3 = vector.load %arg2[%c0, %c0_1, %c0_2] : memref<8x8x128xf32, #tpu.memory_space<vmem>>, vector<1x8x128xf32>
    %4 = vector.shape_cast %3 : vector<1x8x128xf32> to vector<8x128xf32>
    %c1 = arith.constant 1 : index
    %c0_3 = arith.constant 0 : index
    %c0_4 = arith.constant 0 : index
    %5 = vector.load %arg2[%c1, %c0_3, %c0_4] : memref<8x8x128xf32, #tpu.memory_space<vmem>>, vector<1x8x128xf32>
    %6 = vector.shape_cast %5 : vector<1x8x128xf32> to vector<8x128xf32>
    %c2 = arith.constant 2 : index
    %c0_5 = arith.constant 0 : index
    %c0_6 = arith.constant 0 : index
    %7 = vector.load %arg2[%c2, %c0_5, %c0_6] : memref<8x8x128xf32, #tpu.memory_space<vmem>>, vector<1x8x128xf32>
    %8 = vector.shape_cast %7 : vector<1x8x128xf32> to vector<8x128xf32>
    %c3 = arith.constant 3 : index
    %c0_7 = arith.constant 0 : index
    %c0_8 = arith.constant 0 : index
    %9 = vector.load %arg2[%c3, %c0_7, %c0_8] : memref<8x8x128xf32, #tpu.memory_space<vmem>>, vector<1x8x128xf32>
    %10 = vector.shape_cast %9 : vector<1x8x128xf32> to vector<8x128xf32>
    %c4 = arith.constant 4 : index
    %c0_9 = arith.constant 0 : index
    %c0_10 = arith.constant 0 : index
    %11 = vector.load %arg2[%c4, %c0_9, %c0_10] : memref<8x8x128xf32, #tpu.memory_space<vmem>>, vector<1x8x128xf32>
    %12 = vector.shape_cast %11 : vector<1x8x128xf32> to vector<8x128xf32>
    %c5 = arith.constant 5 : index
    %c0_11 = arith.constant 0 : index
    %c0_12 = arith.constant 0 : index
    %13 = vector.load %arg2[%c5, %c0_11, %c0_12] : memref<8x8x128xf32, #tpu.memory_space<vmem>>, vector<1x8x128xf32>
    %14 = vector.shape_cast %13 : vector<1x8x128xf32> to vector<8x128xf32>
    %c6 = arith.constant 6 : index
    %c0_13 = arith.constant 0 : index
    %c0_14 = arith.constant 0 : index
    %15 = vector.load %arg2[%c6, %c0_13, %c0_14] : memref<8x8x128xf32, #tpu.memory_space<vmem>>, vector<1x8x128xf32>
    %16 = vector.shape_cast %15 : vector<1x8x128xf32> to vector<8x128xf32>
    %c7 = arith.constant 7 : index
    %c0_15 = arith.constant 0 : index
    %c0_16 = arith.constant 0 : index
    %17 = vector.load %arg2[%c7, %c0_15, %c0_16] : memref<8x8x128xf32, #tpu.memory_space<vmem>>, vector<1x8x128xf32>
    %18 = vector.shape_cast %17 : vector<1x8x128xf32> to vector<8x128xf32>
    %19 = arith.subf %8, %4 : vector<8x128xf32>
    %20 = arith.divf %19, %12 : vector<8x128xf32>
    %21 = arith.subf %10, %6 : vector<8x128xf32>
    %22 = arith.mulf %14, %20 : vector<8x128xf32>
    %23 = arith.subf %21, %22 : vector<8x128xf32>
    %24 = arith.divf %23, %16 : vector<8x128xf32>
    %25 = arith.mulf %20, %20 : vector<8x128xf32>
    %26 = arith.mulf %24, %24 : vector<8x128xf32>
    %27 = arith.addf %25, %26 : vector<8x128xf32>
    %cst = arith.constant 5.000000e-01 : f32
    %28 = vector.broadcast %cst : f32 to vector<8x128xf32>
    %29 = arith.mulf %28, %27 : vector<8x128xf32>
    %30 = arith.mulf %12, %16 : vector<8x128xf32>
    %31 = math.log %30 : vector<8x128xf32>
    %32 = arith.addf %29, %31 : vector<8x128xf32>
    %cst_17 = arith.constant 1.83787704 : f32
    %33 = vector.broadcast %cst_17 : f32 to vector<8x128xf32>
    %34 = arith.addf %32, %33 : vector<8x128xf32>
    %c0_18 = arith.constant 0 : index
    %c0_19 = arith.constant 0 : index
    %35 = vector.load %arg4[%c0_18, %c0_19] : memref<8x128xf32, #tpu.memory_space<vmem>>, vector<8x128xf32>
    %36 = arith.mulf %18, %34 : vector<8x128xf32>
    %37 = arith.addf %35, %36 : vector<8x128xf32>
    %c0_20 = arith.constant 0 : index
    %c0_21 = arith.constant 0 : index
    %38 = vector.load %arg4[%c0_20, %c0_21] : memref<8x128xf32, #tpu.memory_space<vmem>>, vector<8x128xf32>
    tpu.vector_store %arg4[%c0_20, %c0_21], %37 {strides = array<i32>} : memref<8x128xf32, #tpu.memory_space<vmem>>, vector<8x128xf32>,
    %c0_i32_22 = arith.constant 0 : i32
    %39 = arith.cmpi eq, %arg1, %c0_i32_22 : i32
    %40 = arith.extui %39 : i1 to i32
    %c0_i32_23 = arith.constant 0 : i32
    %41 = arith.cmpi ne, %40, %c0_i32_23 : i32
    scf.if %41 {
      %c0_24 = arith.constant 0 : index
      %c0_25 = arith.constant 0 : index
      %42 = vector.load %arg4[%c0_24, %c0_25] : memref<8x128xf32, #tpu.memory_space<vmem>>, vector<8x128xf32>
      %43 = vector.shape_cast %42 : vector<8x128xf32> to vector<1x8x128xf32>
      %cst_26 = arith.constant dense<0.000000e+00> : vector<1xf32>
      %44 = vector.multi_reduction <add>, %43, %cst_26 [1, 2] : vector<1x8x128xf32> to vector<1xf32>
      %45 = vector.shape_cast %44 : vector<1xf32> to vector<1x1x1xf32>
      %46 = vector.extract %45[0, 0, 0] : f32 from vector<1x1x1xf32>
      %47 = vector.broadcast %46 : f32 to vector<1x1x1xf32>
      %c0_27 = arith.constant 0 : index
      %c0_28 = arith.constant 0 : index
      %c0_29 = arith.constant 0 : index
      %48 = vector.load %arg3[%c0_27, %c0_28, %c0_29] : memref<1x1x1xf32, #tpu.memory_space<vmem>>, vector<1x1x1xf32>
      tpu.vector_store %arg3[%c0_27, %c0_28, %c0_29], %47 {strides = array<i32>} : memref<1x1x1xf32, #tpu.memory_space<vmem>>, vector<1x1x1xf32>,
    } else {
    }
    return
  }
  func.func @transform_0(%arg0: i32, %arg1: i32) -> (i32, i32, i32) {
    %c1_i32 = arith.constant 1 : i32
    %0 = arith.muli %arg0, %c1_i32 : i32
    %1 = arith.addi %0, %arg1 : i32
    %c0_i32 = arith.constant 0 : i32
    %c0_i32_0 = arith.constant 0 : i32
    %c0_i32_1 = arith.constant 0 : i32
    return %c0_i32, %1, %c0_i32_0 : i32, i32, i32
  }
  func.func @transform_1(%arg0: i32, %arg1: i32) -> (i32, i32, i32) {
    %c0_i32 = arith.constant 0 : i32
    %c0_i32_0 = arith.constant 0 : i32
    %c0_i32_1 = arith.constant 0 : i32
    return %arg0, %c0_i32, %c0_i32_0 : i32, i32, i32
  }
}

</mosaic_0001>

<llo_original>
// kernel: tpu_custom_call.1
$region0: #{tpu_custom_call.1}
  #allocation0 [shape = 'u32[]', space=smem, size = 0x4, offset = 0x4, fixed_abs, tag = 'smem constant byte address 0x4 - core index']
  #allocation1 [shape = 'u32[144,128]{1,0:T(1,128)}', space=vmem, size = 0x12000, scoped, tag = 'internal scratch']
  #allocation2 [shape = 'f32[8,128]{1,0:T(8,128)}', space=vmem, size = 0x1000, scoped, tag = 'scratch operand']
  %s0 = inlined_call_operand.hbm [shape: f32[8,16,128], index: 0, kind: input, shape index: {}]
  %s1 = inlined_call_operand.vmem [shape: f32[2,1,1], index: 1, kind: output, shape index: {}]
  %s2 = sld [smem:[#allocation0]]
  $region49: #{tpu_custom_call.1} parent=0
    _
  %s4 = ssub.s32 1, %s2
  %s5 = scalar_select 0, %s4, %s2
  $region1: #{tpu_custom_call.1} parent=0
    #allocation3 [shape = 'u8[65536]{0}', space=vmem, size = 0x10000, scoped, tag = 'input window, operand 0']
    #allocation4 [shape = 's32[2]{0}', space=sflag, size = 0x8, scoped, tag = 'scoped memory for tpu_custom_call.1']
    %6 = vsyncpa [#allocation4], 0
    %s7 = scalar_lea.sflag [#allocation4], 1
    %8 = vsyncpa %s7, 0
    loop: start=0, step=1, limit=4
    $region2: #{tpu_custom_call.1} parent=1 // loop_pre_header
      _
    $region3: #{tpu_custom_call.1} parent=1 // loop_header
      %s10 = sphi 0, %s14
      %p11 = scmp.ge.s32.totalorder %s10, 4
      %s17 = sphi 0, %s29
      %s18 = sphi 0, %s25
      %s19 = sphi 0, %s17
      %s20 = sphi 0, %s18
      %s21 = sphi 0, %s19
      %s22 = sphi 0, %s20
      %s34 = sphi 0, %s36
      %s37 = sphi 0, %s34
      %s38 = sphi 0, %s37
      %s54 = sphi 0, %s38
      %s60 = sphi 0, %s62
      %s63 = sphi 0, %s60
      %s64 = sphi 0, %s63
      %s80 = sphi 0, %s64
    $region4: #{tpu_custom_call.1} parent=1 // loop_header_branch
      %13 = sbr.rel (%p11) target = $region8
    $region5: #{tpu_custom_call.1} parent=1 // loop_body
      %s15 = ssub.s32 %s10, 1
      %s16 = ssub.s32 %s10, 2
      %s23 = sadd.s32 1, %s18
      %p24 = scmp.ge.s32.totalorder %s23, 1
      %s25 = scalar_select %p24, 0, %s23
      %s26 = sadd.s32 1, %s17
      %s27 = scalar_select %p24, %s26, %s17
      %p28 = scmp.ge.s32.totalorder %s27, 2
      %s29 = scalar_select %p28, 0, %s27
      %s30 = sadd.s32 %s17, %s18
      %s31 = sadd.s32 %s29, %s25
      %s32 = ssub.s32 %s30, %s31
      %p33 = scmp.eq.s32.totalorder %s32, 0
      %s35 = sadd.s32 %s34, 1
      %s36 = scalar_select %p33, %s34, %s35
      %p39 = pneg %p33
      %p40 = scmp.eq.s32.totalorder %s10, 1
      %p41 = por %p39, %p40
      %p42 = scmp.ne.s32.totalorder %s34, %s37
      %p43 = scmp.eq.s32.totalorder %s10, 0
      %p44 = por %p42, %p43
      %p45 = scmp.ne.s32.totalorder %s34, %s37
      %p46 = scmp.eq.s32.totalorder %s15, 1
      %p47 = por %p45, %p46
      %p48 = scmp.ne.s32.totalorder %s37, %s38
      %p49 = scmp.eq.s32.totalorder %s15, 0
      %p50 = por %p48, %p49
      %p51 = scmp.ne.s32.totalorder %s37, %s38
      %p52 = scmp.eq.s32.totalorder %s16, 1
      %p53 = por %p51, %p52
      %p55 = scmp.ne.s32.totalorder %s38, %s54
      %p56 = scmp.eq.s32.totalorder %s16, 0
      %p57 = por %p55, %p56
      %s58 = ssub.s32 %s17, %s29
      %p59 = scmp.eq.s32.totalorder %s58, 0
      %s61 = sadd.s32 %s60, 1
      %s62 = scalar_select %p59, %s60, %s61
      %p65 = pneg %p59
      %p66 = scmp.eq.s32.totalorder %s10, 1
      %p67 = por %p65, %p66
      %p68 = scmp.ne.s32.totalorder %s60, %s63
      %p69 = scmp.eq.s32.totalorder %s10, 0
      %p70 = por %p68, %p69
      %p71 = scmp.ne.s32.totalorder %s60, %s63
      %p72 = scmp.eq.s32.totalorder %s15, 1
      %p73 = por %p71, %p72
      %p74 = scmp.ne.s32.totalorder %s63, %s64
      %p75 = scmp.eq.s32.totalorder %s15, 0
      %p76 = por %p74, %p75
      %p77 = scmp.ne.s32.totalorder %s63, %s64
      %p78 = scmp.eq.s32.totalorder %s16, 1
      %p79 = por %p77, %p78
      %p81 = scmp.ne.s32.totalorder %s64, %s80
      %p82 = scmp.eq.s32.totalorder %s16, 0
      %p83 = por %p81, %p82
      %p84 = scmp.le.s32.totalorder 1, %s10
      %p85 = scmp.lt.s32.totalorder %s10, 3
      %p86 = pnand %p84, %p85
      %p87 = pneg %p86
      // Predicated region
      $region9: #{tpu_custom_call.1} parent=5 // pred_check
        _
      $region10: #{tpu_custom_call.1} parent=5 // pred_check_branch
        %89 = sbr.rel (%p86) target = $region12
      $region11: #{tpu_custom_call.1} parent=5 // pred_region
        %s90 = ssub.s32 %s10, 1
      $region12: #{tpu_custom_call.1} parent=5 // pred_fallthru
        _
      %p91 = scmp.lt.s32.totalorder %s10, 2
      // Predicated region
      $region13: #{tpu_custom_call.1} parent=5 // pred_check
        %p92 = pneg %p91
      $region14: #{tpu_custom_call.1} parent=5 // pred_check_branch
        %94 = sbr.rel (%p92) target = $region16
      $region15: #{tpu_custom_call.1} parent=5 // pred_region
        // Predicated region
        $region17: #{tpu_custom_call.1} parent=15 // pred_check
          %p95 = pneg %p44
        $region18: #{tpu_custom_call.1} parent=15 // pred_check_branch
          %97 = sbr.rel (%p95) target = $region20
        $region19: #{tpu_custom_call.1} parent=15 // pred_region
          %s98 = sand.u32 %s34, 1
          %s99 = scalar_lea.sflag [#allocation4], %s98
          %s100 = sand.u32 %s34, 1
          %s101 = smul.addr %s100, 64
          %s102 = scalar_lea.vmem [#allocation3], %s101
          %s103 = sadd.s32 %s17, %s18
          %s105 = ssub.s32 1024, 1024
          %106 = vsyncadd %s99, %s105
          %s107 = smul.addr %s103, 128
          %s108 = scalar_lea.hbm %s0, %s107
          %s109 = sshll.u32 %s102, 4
          %s110 = int_to_ptr.vmem [resolvable:$true] %s109
          %115 = dma.hbm_to_vmem [thread:$0]  %s108, 1024, %s110, %s99, 256, 128, 8
        $region20: #{tpu_custom_call.1} parent=15 // pred_fallthru
          _
      $region16: #{tpu_custom_call.1} parent=5 // pred_fallthru
        _
      %p116 = scmp.le.s32.totalorder 1, %s10
      %p117 = scmp.lt.s32.totalorder %s10, 3
      %p118 = pnand %p116, %p117
      %p119 = pneg %p118
      // Predicated region
      $region21: #{tpu_custom_call.1} parent=5 // pred_check
        _
      $region22: #{tpu_custom_call.1} parent=5 // pred_check_branch
        %121 = sbr.rel (%p118) target = $region24
      $region23: #{tpu_custom_call.1} parent=5 // pred_region
        %s122 = ssub.s32 %s10, 1
        %s123 = sand.u32 %s37, 1
        %s124 = scalar_lea.sflag [#allocation4], %s123
        %s125 = sand.u32 %s37, 1
        %s126 = smul.addr %s125, 64
        %s127 = scalar_lea.vmem [#allocation3], %s126
        // Predicated region
        $region25: #{tpu_custom_call.1} parent=23 // pred_check
          %p128 = pneg %p50
        $region26: #{tpu_custom_call.1} parent=23 // pred_check_branch
          %130 = sbr.rel (%p128) target = $region28
        $region27: #{tpu_custom_call.1} parent=23 // pred_region
          %131 = dma.done %s124, 1024
        $region28: #{tpu_custom_call.1} parent=23 // pred_fallthru
          _
        %s132 = sand.u32 %s37, 1
        %s133 = scalar_lea.sflag [#allocation4], %s132
        %s134 = sand.u32 %s37, 1
        %s135 = smul.addr %s134, 64
        %s136 = scalar_lea.vmem [#allocation3], %s135
        %p137 = pneg %p50
        %p138 = pneg %p47
        %p139 = pneg %p76
        %p140 = pneg %p73
        %p141 = scmp.lt.s32.totalorder %s19, 1
        %s142 = scalar_select %p141, %s19, 1
        %s143 = scalar_lea.vmem %s1, %s142
        %s144 = sadd.s32 %s19, %s20
        %p145 = scmp.lt.s32.totalorder %s19, 1
        %s146 = scalar_select %p145, %s19, 1
        %s147 = scalar_lea.vmem %s1, %s146
        %p148 = scmp.eq.s32.totalorder %s20, 0
        // Predicated region
        $region29: #{tpu_custom_call.1} parent=23 // pred_check
          %p149 = pneg %p148
        $region30: #{tpu_custom_call.1} parent=23 // pred_check_branch
          %151 = sbr.rel (%p149) target = $region32
        $region31: #{tpu_custom_call.1} parent=23 // pred_region
          %152 = vst [vmem:[#allocation2] sm:$0xff] 0.0
        $region32: #{tpu_custom_call.1} parent=23 // pred_fallthru
          _
        %v153 = vld [vmem:[%s127] sm:$0xff]
        %s154 = scalar_lea.vmem %s127, 8 [#allocation3]
        %v155 = vld [vmem:[%s154] sm:$0xff]
        %s156 = scalar_lea.vmem %s127, 16 [#allocation3]
        %v157 = vld [vmem:[%s156] sm:$0xff]
        %s158 = scalar_lea.vmem %s127, 24 [#allocation3]
        %v159 = vld [vmem:[%s158] sm:$0xff]
        %s160 = scalar_lea.vmem %s127, 32 [#allocation3]
        %v161 = vld [vmem:[%s160] sm:$0xff]
        %s162 = scalar_lea.vmem %s127, 40 [#allocation3]
        %v163 = vld [vmem:[%s162] sm:$0xff]
        %s164 = scalar_lea.vmem %s127, 48 [#allocation3]
        %v165 = vld [vmem:[%s164] sm:$0xff]
        %s166 = scalar_lea.vmem %s127, 56 [#allocation3]
        %v167 = vld [vmem:[%s166] sm:$0xff]
        %v168 = vsub.f32 %v157, %v153
        %v169 = vrcp.pop %v161
        %v170 = vmul.f32 %v168, %v169
        %v171 = vsub.f32 %v159, %v155
        %v172 = vmul.f32 %v163, %v170
        %v173 = vsub.f32 %v171, %v172
        %v174 = vrcp.pop %v165
        %v175 = vmul.f32 %v173, %v174
        %v176 = vmul.f32 %v170, %v170
        %v177 = vmul.f32 %v175, %v175
        %v178 = vadd.f32 %v176, %v177
        %v179 = vmul.f32 %v178, 0.5
        %v180 = vmul.f32 %v161, %v165
        %v181 = vlog2.pop %v180
        %v182 = vmul.f32 %v181, 0.6931472
        %v183 = vadd.f32 %v179, %v182
        %v184 = vadd.f32 %v183, 1.837877
        %v185 = vld [vmem:[#allocation2] sm:$0xff]
        %v186 = vmul.f32 %v167, %v184
        %v187 = vadd.f32 %v185, %v186
        %188 = vst [vmem:[#allocation2] sm:$0xff] %v187
        // Predicated region
        $region33: #{tpu_custom_call.1} parent=23 // pred_check
          %p189 = pneg %p148
        $region34: #{tpu_custom_call.1} parent=23 // pred_check_branch
          %191 = sbr.rel (%p189) target = $region36
        $region35: #{tpu_custom_call.1} parent=23 // pred_region
          %v192 = vld [vmem:[#allocation2] sm:$0xff]
          %193 = vadd.xlane.f32.xlu0 %v192
          %v194 = vpop.xlane.xlu0 %193
          %v195 = vrot.slane %v194, 4
          %v196 = vadd.f32 %v194, %v195
          %v197 = vrot.slane %v196, 2
          %v198 = vadd.f32 %v196, %v197
          %v199 = vrot.slane %v198, 1
          %v200 = vadd.f32 %v198, %v199
          %s201 = vtos %v200
          %v202 = vstv %s201
          %vm203 = vcmask 0
          %204 = vst.msk [vmem:[%s147] sm:$0x1] %vm203, %v202
        $region36: #{tpu_custom_call.1} parent=23 // pred_fallthru
          _
        %p205 = scmp.lt.s32.totalorder %s19, 1
        %s206 = scalar_select %p205, %s19, 1
        %s207 = scalar_lea.vmem %s1, %s206
        // Predicated region
        $region37: #{tpu_custom_call.1} parent=23 // pred_check
          %p208 = pneg %p73
        $region38: #{tpu_custom_call.1} parent=23 // pred_check_branch
          %210 = sbr.rel (%p208) target = $region40
        $region39: #{tpu_custom_call.1} parent=23 // pred_region
          _
        $region40: #{tpu_custom_call.1} parent=23 // pred_fallthru
          _
      $region24: #{tpu_custom_call.1} parent=5 // pred_fallthru
        _
      %p211 = scmp.le.s32.totalorder 2, %s10
      // Predicated region
      $region41: #{tpu_custom_call.1} parent=5 // pred_check
        %p212 = pneg %p211
      $region42: #{tpu_custom_call.1} parent=5 // pred_check_branch
        %214 = sbr.rel (%p212) target = $region44
      $region43: #{tpu_custom_call.1} parent=5 // pred_region
        %s215 = ssub.s32 %s10, 2
        // Predicated region
        $region45: #{tpu_custom_call.1} parent=43 // pred_check
          %p216 = pneg %p79
        $region46: #{tpu_custom_call.1} parent=43 // pred_check_branch
          %218 = sbr.rel (%p216) target = $region48
        $region47: #{tpu_custom_call.1} parent=43 // pred_region
          %p219 = scmp.lt.s32.totalorder %s21, 1
          %s220 = scalar_select %p219, %s21, 1
          %s221 = scalar_lea.vmem %s1, %s220
        $region48: #{tpu_custom_call.1} parent=43 // pred_fallthru
          _
      $region44: #{tpu_custom_call.1} parent=5 // pred_fallthru
        _
    $region6: #{tpu_custom_call.1} parent=1 // loop_footer
      %s14 = sadd.s32 1, %s10
    $region7: #{tpu_custom_call.1} parent=1 // loop_footer_branch
      %9 = sbr.rel target = $region3
    $region8: #{tpu_custom_call.1} parent=1 // loop_exit
      _
    %222 = vsyncpa [#allocation4], 1
    %s223 = scalar_lea.sflag [#allocation4], 1
    %224 = vsyncpa %s223, 1

</llo_original>
